<compile_context>
chip_gen: v7x
topology: tpu7x:2x2x1
jax: 0.10.0
libtpu: 0.0.40
codegen_flags: <defaults>
</compile_context>

<pallas_src>
import functools

import jax
import jax.numpy as jnp
from jax.experimental import pallas as pl
from jax.experimental.pallas import tpu as pltpu

_SUB = 16  # sublane alignment that also satisfies bf16 (16,128) native tiling


def _round_up(x, m):
    return ((x + m - 1) // m) * m


def param_actor_kernel(state_ref, w_ref, b_ref, out_ref, *,
                       seg_rows, n_hidden, wpad, sp, activation):
    """One batch tile of the full MLP + fused output/passthrough stage.

    w_ref : (sum(seg_rows), wpad) packed weights (row segments per layer;
            last segment = [W_out (wpad rows) ; W_pass (sp rows)]).
    b_ref : (n_hidden + 1, wpad) f32 packed biases (last row = b_out + b_pass).
    """
    cdt = w_ref.dtype                                   # compute dtype (bf16 or f32)
    x = state_ref[...].astype(cdt)                      # (tile_b, sp)

    # Hidden layers (statically unrolled): h = act(h @ W_i + b_i), f32 accumulation.
    h = x
    row = 0
    for i in range(n_hidden):
        rows = seg_rows[i]
        w = w_ref[row:row + rows, :]                    # (rows, wpad), static slice
        a = jnp.dot(h, w, preferred_element_type=jnp.float32) + b_ref[i:i + 1, :]
        if activation == "relu":
            a = jnp.maximum(a, 0.0)
        else:  # leaky_relu
            a = jnp.where(a > 0.0, a, 0.01 * a)
        h = a.astype(cdt)
        row += rows

    # Fused output + passthrough as two register-resident dots (no scratch):
    #   out = h @ W_out + x @ W_pass + (b_out + b_pass)
    w_out = w_ref[row:row + wpad, :]                    # (wpad, wpad)
    w_pass = w_ref[row + wpad:row + wpad + sp, :]       # (sp, wpad)
    out = jnp.dot(h, w_out, preferred_element_type=jnp.float32)
    out = out + jnp.dot(x, w_pass, preferred_element_type=jnp.float32)
    out = out + b_ref[n_hidden:n_hidden + 1, :]
    out_ref[...] = out.astype(out_ref.dtype)


def pack_params(params, state_size, hidden_layers, action_parameter_size,
                *, compute_dtype=jnp.bfloat16):
    """Pack per-layer (transposed) weights into one slab (compute_dtype) and
    biases into one f32 slab, zero-padded to lane-dense 128-wide columns, with
    the output and passthrough layers fused ([W_out ; W_pass], b_out + b_pass)."""
    n_hidden = len(hidden_layers)
    sp = _round_up(state_size, _SUB)                                    # aligned input width
    wpad = _round_up(max(max(hidden_layers), action_parameter_size), 128)  # lane-dense width

    hidden_w = [params[2 * i] for i in range(n_hidden)]
    hidden_b = [params[2 * i + 1] for i in range(n_hidden)]
    wout, bout, wpass, bpass = params[2 * n_hidden: 2 * n_hidden + 4]

    seg_rows = [sp] + [wpad] * (n_hidden - 1) + [wpad + sp]

    segs, biases = [], []
    for i in range(n_hidden):
        w = hidden_w[i]
        wp = jnp.zeros((seg_rows[i], wpad), jnp.float32)
        wp = wp.at[:w.shape[0], :w.shape[1]].set(w.astype(jnp.float32))
        segs.append(wp)
        b = hidden_b[i].reshape(1, -1).astype(jnp.float32)
        biases.append(jnp.zeros((1, wpad), jnp.float32).at[:, :b.shape[1]].set(b))

    # Fused final weight: rows [0, wpad) = W_out (padded), rows [wpad, wpad+sp) = W_pass.
    wf = jnp.zeros((wpad + sp, wpad), jnp.float32)
    wf = wf.at[:wout.shape[0], :wout.shape[1]].set(wout.astype(jnp.float32))
    wf = wf.at[wpad:wpad + wpass.shape[0], :wpass.shape[1]].set(wpass.astype(jnp.float32))
    segs.append(wf)
    bf = (bout + bpass).reshape(1, -1).astype(jnp.float32)
    biases.append(jnp.zeros((1, wpad), jnp.float32).at[:, :bf.shape[1]].set(bf))

    W_all = jnp.concatenate(segs, axis=0).astype(compute_dtype)  # (sum(seg_rows), wpad)
    B_all = jnp.concatenate(biases, axis=0)                      # (n_hidden + 1, wpad), f32
    meta = dict(seg_rows=tuple(int(r) for r in seg_rows), n_hidden=n_hidden,
                sp=sp, wpad=wpad, state_size=state_size,
                apsz=action_parameter_size)
    return W_all, B_all, meta


def param_actor_forward(state, W_all, B_all, meta, *, max_tile_b=2048,
                        activation="relu"):
    B, S = state.shape
    sp, wpad, apsz = meta["sp"], meta["wpad"], meta["apsz"]
    out_dtype = W_all.dtype  # bf16 output halves writeback; f32 if compute_dtype=f32

    x = state.astype(jnp.float32)
    if sp != S:
        x = jnp.pad(x, ((0, 0), (0, sp - S)))     # zero feature pad (weight rows are zero)

    # Batch tiling: large tiles amortize the ~0.35 us per-grid-step overhead,
    # but cap at half the aligned batch so large B still gives >=2 grid steps
    # for v7x's two TensorCores to share.
    b_al = _round_up(B, _SUB)
    tile_b = min(max_tile_b, max(_SUB, _round_up(b_al // 2, _SUB)))
    b_pad = _round_up(b_al, tile_b)
    if b_pad != B:
        x = jnp.pad(x, ((0, b_pad - B), (0, 0)))
    grid = (b_pad // tile_b,)

    kernel = functools.partial(param_actor_kernel,
                               seg_rows=meta["seg_rows"],
                               n_hidden=meta["n_hidden"],
                               wpad=wpad, sp=sp, activation=activation)

    out = pl.pallas_call(
        kernel,
        out_shape=jax.ShapeDtypeStruct((b_pad, wpad), out_dtype),
        grid_spec=pltpu.PrefetchScalarGridSpec(
            num_scalar_prefetch=0,
            grid=grid,
            in_specs=[
                pl.BlockSpec((tile_b, sp), lambda i: (i, 0)),      # state tile streams
                pl.BlockSpec(W_all.shape, lambda i: (0, 0)),       # weights VMEM-resident
                pl.BlockSpec(B_all.shape, lambda i: (0, 0)),       # biases VMEM-resident
            ],
            out_specs=pl.BlockSpec((tile_b, wpad), lambda i: (i, 0)),  # lane-dense (128) store
        ),
        compiler_params=pltpu.CompilerParams(
            dimension_semantics=("parallel",),     # shard batch tiles across v7x's 2 TCs
            vmem_limit_bytes=32 << 20,
        ),
    )(x, W_all, B_all)

    return out[:B, :apsz].astype(jnp.float32)


def init_params(key, state_size, hidden_layers, action_parameter_size,
                output_layer_init_std=None):
    """Deterministic init mirroring ParamActor.__init__ (init_type='kaiming', relu).
    Weights are stored transposed, (in_features, out_features)."""
    ks = jax.random.split(key, len(hidden_layers) + 1)
    params = []
    in_sz = state_size
    # hidden layers: kaiming_normal_ (fan_in, gain=sqrt(2) for relu), zero bias
    for i, h in enumerate(hidden_layers):
        std = jnp.sqrt(2.0 / in_sz)
        w = jax.random.normal(ks[i], (in_sz, h), dtype=jnp.float32) * std
        b = jnp.zeros((1, h), dtype=jnp.float32)
        params.extend([w, b])
        in_sz = h
    # output layer: normal(std) if output_layer_init_std else zeros; zero bias
    if output_layer_init_std is not None:
        wout = (jax.random.normal(ks[-1], (in_sz, action_parameter_size),
                                  dtype=jnp.float32) * output_layer_init_std)
    else:
        wout = jnp.zeros((in_sz, action_parameter_size), dtype=jnp.float32)
    bout = jnp.zeros((1, action_parameter_size), dtype=jnp.float32)
    # passthrough layer: zeros (frozen in the original module)
    wpass = jnp.zeros((state_size, action_parameter_size), dtype=jnp.float32)
    bpass = jnp.zeros((1, action_parameter_size), dtype=jnp.float32)
    return (*params, wout, bout, wpass, bpass)


def reference_forward(state, params):
    """Pure-JAX float32 reference for correctness checking (unpacked params)."""
    (w1, b1, w2, b2, wout, bout, wpass, bpass) = params
    x = state.astype(jnp.float32)
    h = jnp.maximum(x @ w1 + b1, 0.0)
    h = jnp.maximum(h @ w2 + b2, 0.0)
    ap = h @ wout + bout
    ap = ap + (x @ wpass + bpass)
    return ap


if __name__ == "__main__":
    # Small shapes consistent with the module:
    B = 2
    state_size = 32
    hidden_layers = (64, 64)
    action_parameter_size = 16

    key = jax.random.PRNGKey(0)
    k_state, k_params = jax.random.split(key)

    state = jax.random.normal(k_state, (B, state_size), dtype=jnp.float32)
    params = init_params(k_params, state_size, hidden_layers,
                         action_parameter_size, output_layer_init_std=1e-3)

    W_all, B_all, meta = pack_params(params, state_size, hidden_layers,
                                     action_parameter_size,
                                     compute_dtype=jnp.bfloat16)

    out = param_actor_forward(state, W_all, B_all, meta)
    out = jax.block_until_ready(out)

    ref = reference_forward(state, params)
    assert out.shape == (B, action_parameter_size)
    # bf16 GEMM operands + bf16 writeback (f32 accumulation) -> loosened tolerance.
    assert jnp.allclose(out, ref, atol=1e-2, rtol=1e-2), "mismatch vs reference"

    print("KERNEL_OK")
</pallas_src>

<mosaic_0001>
module attributes {stable_mosaic.version = 11 : i64} {
  func.func @param_actor_kernel(%arg0: i32, %arg1: memref<16x32xf32, #tpu.memory_space<vmem>>, %arg2: memref<320x128xbf16, #tpu.memory_space<vmem>>, %arg3: memref<3x128xf32, #tpu.memory_space<vmem>>, %arg4: memref<16x128xbf16, #tpu.memory_space<vmem>>) attributes {dimension_semantics = [#tpu.dimension_semantics<parallel>], iteration_bounds = array<i64: 1>, scalar_prefetch = 0 : i64, scratch_operands = 0 : i64, tpu.core_type = #tpu.core_type<tc>, window_params = [{transform_indices = @transform_0, window_bounds = array<i64: 16, 32>}, {pipeline_mode = #tpu.pipeline_mode<synchronous>, transform_indices = @transform_1, window_bounds = array<i64: 320, 128>}, {pipeline_mode = #tpu.pipeline_mode<synchronous>, transform_indices = @transform_2, window_bounds = array<i64: 3, 128>}, {transform_indices = @transform_3, window_bounds = array<i64: 16, 128>}]} {
    %c0 = arith.constant 0 : index
    %c0_0 = arith.constant 0 : index
    %0 = vector.load %arg1[%c0, %c0_0] : memref<16x32xf32, #tpu.memory_space<vmem>>, vector<16x32xf32>
    %1 = arith.truncf %0 : vector<16x32xf32> to vector<16x32xbf16>
    %c0_1 = arith.constant 0 : index
    %c0_2 = arith.constant 0 : index
    %2 = vector.load %arg2[%c0_1, %c0_2] : memref<320x128xbf16, #tpu.memory_space<vmem>>, vector<32x128xbf16>
    %cst = arith.constant dense<0.000000e+00> : vector<16x128xf32>
    %3 = tpu.matmul %1, %2, %cst {dimension_numbers = #tpu.dot_dimension_numbers<[1], [0], [0], [1], [0, 0, 1, 1], [], []>} : vector<16x32xbf16>, vector<32x128xbf16>, vector<16x128xf32> -> vector<16x128xf32>
    %c0_3 = arith.constant 0 : index
    %c0_4 = arith.constant 0 : index
    %4 = vector.load %arg3[%c0_3, %c0_4] : memref<3x128xf32, #tpu.memory_space<vmem>>, vector<1x128xf32>
    %5 = vector.broadcast %4 : vector<1x128xf32> to vector<16x128xf32>
    %6 = arith.addf %3, %5 : vector<16x128xf32>
    %cst_5 = arith.constant 0.000000e+00 : f32
    %7 = vector.broadcast %cst_5 : f32 to vector<16x128xf32>
    %8 = arith.maximumf %6, %7 : vector<16x128xf32>
    %9 = arith.truncf %8 : vector<16x128xf32> to vector<16x128xbf16>
    %c32 = arith.constant 32 : index
    %c0_6 = arith.constant 0 : index
    %10 = vector.load %arg2[%c32, %c0_6] : memref<320x128xbf16, #tpu.memory_space<vmem>>, vector<128x128xbf16>
    %cst_7 = arith.constant dense<0.000000e+00> : vector<16x128xf32>
    %11 = tpu.matmul %9, %10, %cst_7 {dimension_numbers = #tpu.dot_dimension_numbers<[1], [0], [0], [1], [0, 0, 1, 1], [], []>} : vector<16x128xbf16>, vector<128x128xbf16>, vector<16x128xf32> -> vector<16x128xf32>
    %c1 = arith.constant 1 : index
    %c0_8 = arith.constant 0 : index
    %12 = vector.load %arg3[%c1, %c0_8] : memref<3x128xf32, #tpu.memory_space<vmem>>, vector<1x128xf32>
    %13 = vector.broadcast %12 : vector<1x128xf32> to vector<16x128xf32>
    %14 = arith.addf %11, %13 : vector<16x128xf32>
    %cst_9 = arith.constant 0.000000e+00 : f32
    %15 = vector.broadcast %cst_9 : f32 to vector<16x128xf32>
    %16 = arith.maximumf %14, %15 : vector<16x128xf32>
    %17 = arith.truncf %16 : vector<16x128xf32> to vector<16x128xbf16>
    %c160 = arith.constant 160 : index
    %c0_10 = arith.constant 0 : index
    %18 = vector.load %arg2[%c160, %c0_10] : memref<320x128xbf16, #tpu.memory_space<vmem>>, vector<128x128xbf16>
    %c288 = arith.constant 288 : index
    %c0_11 = arith.constant 0 : index
    %19 = vector.load %arg2[%c288, %c0_11] : memref<320x128xbf16, #tpu.memory_space<vmem>>, vector<32x128xbf16>
    %cst_12 = arith.constant dense<0.000000e+00> : vector<16x128xf32>
    %20 = tpu.matmul %17, %18, %cst_12 {dimension_numbers = #tpu.dot_dimension_numbers<[1], [0], [0], [1], [0, 0, 1, 1], [], []>} : vector<16x128xbf16>, vector<128x128xbf16>, vector<16x128xf32> -> vector<16x128xf32>
    %cst_13 = arith.constant dense<0.000000e+00> : vector<16x128xf32>
    %21 = tpu.matmul %1, %19, %cst_13 {dimension_numbers = #tpu.dot_dimension_numbers<[1], [0], [0], [1], [0, 0, 1, 1], [], []>} : vector<16x32xbf16>, vector<32x128xbf16>, vector<16x128xf32> -> vector<16x128xf32>
    %22 = arith.addf %20, %21 : vector<16x128xf32>
    %c2 = arith.constant 2 : index
    %c0_14 = arith.constant 0 : index
    %23 = vector.load %arg3[%c2, %c0_14] : memref<3x128xf32, #tpu.memory_space<vmem>>, vector<1x128xf32>
    %24 = vector.broadcast %23 : vector<1x128xf32> to vector<16x128xf32>
    %25 = arith.addf %22, %24 : vector<16x128xf32>
    %26 = arith.truncf %25 : vector<16x128xf32> to vector<16x128xbf16>
    %c0_15 = arith.constant 0 : index
    %c0_16 = arith.constant 0 : index
    %27 = vector.load %arg4[%c0_15, %c0_16] : memref<16x128xbf16, #tpu.memory_space<vmem>>, vector<16x128xbf16>
    tpu.vector_store %arg4[%c0_15, %c0_16], %26 {strides = array<i32>} : memref<16x128xbf16, #tpu.memory_space<vmem>>, vector<16x128xbf16>,
    return
  }
  func.func @transform_0(%arg0: i32) -> (i32, i32) {
    %c0_i32 = arith.constant 0 : i32
    %c0_i32_0 = arith.constant 0 : i32
    return %arg0, %c0_i32 : i32, i32
  }
  func.func @transform_1(%arg0: i32) -> (i32, i32) {
    %c0_i32 = arith.constant 0 : i32
    %c0_i32_0 = arith.constant 0 : i32
    %c0_i32_1 = arith.constant 0 : i32
    return %c0_i32, %c0_i32_0 : i32, i32
  }
  func.func @transform_2(%arg0: i32) -> (i32, i32) {
    %c0_i32 = arith.constant 0 : i32
    %c0_i32_0 = arith.constant 0 : i32
    %c0_i32_1 = arith.constant 0 : i32
    return %c0_i32, %c0_i32_0 : i32, i32
  }
  func.func @transform_3(%arg0: i32) -> (i32, i32) {
    %c0_i32 = arith.constant 0 : i32
    %c0_i32_0 = arith.constant 0 : i32
    return %arg0, %c0_i32 : i32, i32
  }
}

</mosaic_0001>

<llo_original>
// kernel: tpu_custom_call.1
$region0: #{tpu_custom_call.1}
  #allocation0 [shape = 'u32[]', space=smem, size = 0x4, offset = 0x4, fixed_abs, tag = 'smem constant byte address 0x4 - core index']
  #allocation1 [shape = 'u32[144,128]{1,0:T(1,128)}', space=vmem, size = 0x12000, scoped, tag = 'internal scratch']
  %s0 = inlined_call_operand.hbm [shape: f32[16,32], index: 0, kind: input, shape index: {}]
  %s1 = inlined_call_operand.hbm [shape: bf16[320,128], index: 1, kind: input, shape index: {}]
  %s2 = inlined_call_operand.vmem [shape: f32[3,128], index: 2, kind: input, shape index: {}]
  %s3 = inlined_call_operand.hbm [shape: bf16[16,128], index: 3, kind: output, shape index: {}]
  %s4 = sld [smem:[#allocation0]]
  $region30: #{tpu_custom_call.1} parent=0
    _
  %s6 = ssub.s32 1, %s4
  %s7 = scalar_select 0, %s6, %s4
  $region1: #{tpu_custom_call.1} parent=0
    #allocation2 [shape = 'u8[8192]{0}', space=vmem, size = 0x2000, scoped, tag = 'input window, operand 0, single buffered']
    #allocation3 [shape = 's32[1]{0}', space=sflag, size = 0x4, scoped, tag = 'scoped memory for tpu_custom_call.1']
    #allocation4 [shape = 's32[1]{0}', space=sflag, size = 0x4, scoped, tag = 'scoped memory for tpu_custom_call.1']
    #allocation5 [shape = 'u8[81920]{0}', space=vmem, size = 0x14000, scoped, tag = 'input window, operand 1, single buffered']
    #allocation6 [shape = 's32[1]{0}', space=sflag, size = 0x4, scoped, tag = 'scoped memory for tpu_custom_call.1']
    #allocation7 [shape = 'u8[4096]{0}', space=vmem, size = 0x1000, scoped, tag = 'output window, operand 0, single buffered']
    %8 = vsyncpa [#allocation3], 0
    %9 = vsyncpa [#allocation6], 0
    %10 = vsyncpa [#allocation4], 0
    // Predicated region
    $region2: #{tpu_custom_call.1} parent=1 // pred_check
      _
    $region3: #{tpu_custom_call.1} parent=1 // pred_check_branch
      %12 = sbr.rel (0) target = $region5
    $region4: #{tpu_custom_call.1} parent=1 // pred_region
      %s14 = ssub.s32 256, 256
      %15 = vsyncadd [#allocation3], %s14
      %s16 = sshll.u32 [#allocation2], 4
      %s17 = int_to_ptr.vmem [resolvable:$true] %s16
      %22 = dma.hbm_to_vmem [thread:$0]  %s0, 256, %s17, [#allocation3], 128, 128, 8
    $region5: #{tpu_custom_call.1} parent=1 // pred_fallthru
      _
    // Predicated region
    $region6: #{tpu_custom_call.1} parent=1 // pred_check
      _
    $region7: #{tpu_custom_call.1} parent=1 // pred_check_branch
      %24 = sbr.rel (0) target = $region9
    $region8: #{tpu_custom_call.1} parent=1 // pred_region
      %s26 = ssub.s32 2560, 2560
      %27 = vsyncadd [#allocation6], %s26
      %s28 = sshll.u32 [#allocation5], 4
      %s29 = int_to_ptr.vmem [resolvable:$true] %s28
      %34 = dma.hbm_to_vmem [thread:$0]  %s1, 2560, %s29, [#allocation6], 64, 64, 4
    $region9: #{tpu_custom_call.1} parent=1 // pred_fallthru
      _
    // Predicated region
    $region10: #{tpu_custom_call.1} parent=1 // pred_check
      _
    $region11: #{tpu_custom_call.1} parent=1 // pred_check_branch
      %36 = sbr.rel (0) target = $region13
    $region12: #{tpu_custom_call.1} parent=1 // pred_region
      _
    $region13: #{tpu_custom_call.1} parent=1 // pred_fallthru
      _
    // Predicated region
    $region14: #{tpu_custom_call.1} parent=1 // pred_check
      _
    $region15: #{tpu_custom_call.1} parent=1 // pred_check_branch
      %38 = sbr.rel (0) target = $region17
    $region16: #{tpu_custom_call.1} parent=1 // pred_region
      %39 = dma.done [#allocation3], 256
    $region17: #{tpu_custom_call.1} parent=1 // pred_fallthru
      _
    // Predicated region
    $region18: #{tpu_custom_call.1} parent=1 // pred_check
      _
    $region19: #{tpu_custom_call.1} parent=1 // pred_check_branch
      %41 = sbr.rel (0) target = $region21
    $region20: #{tpu_custom_call.1} parent=1 // pred_region
      %42 = dma.done [#allocation6], 2560
    $region21: #{tpu_custom_call.1} parent=1 // pred_fallthru
      _
    %v44 = vld [vmem:[#allocation2] sm:$0xff]
    %v45 = vld [vmem:[#allocation2 + $0x8] sm:$0xff]
    %v46 = vpack.c.bf16 %v45, %v44
    %v47 = vld [vmem:[#allocation5] sm:$0xf]
    %v48 = vld [vmem:[#allocation5 + $0x4] sm:$0xf]
    %v49 = vld [vmem:[#allocation5 + $0x8] sm:$0xf]
    %v50 = vld [vmem:[#allocation5 + $0xc] sm:$0xf]
    %v51 = vld [vmem:[%s2] sm:$0x1]
    %v52 = vlaneseq
    %v53 = vshrl.u32 %v52, 7
    %v54 = vsub.s32 0, %v53
    %v55 = vrot.slane %v51, %v54
    %v60 = vunpack.c.l.b16 %v47
    %v61 = vunpack.c.l.b16 %v48
    %v62 = vunpack.c.l.b16 %v49
    %v63 = vunpack.c.l.b16 %v50
    %v64 = vpack.c.b16 %v61, %v60
    %v65 = vpack.c.b16 %v63, %v62
    %vm68 = vcmask 261120
    %v70 = vsel %vm68, %v46, 0
    %72 = vmatprep.subr.bf16.mxu0 0
    %73 = vmatpush1.bf16.msra.mxu0 %v64
    %74 = vmatprep.subr.bf16.mxu0 0
    %75 = vmatpush1.bf16.msra.mxu0 %v65
    %76 = vmatprep.subr.bf16.mxu0 0
    %77 = vmatpush1.bf16.msra.mxu0 0
    %78 = vmatprep.subr.bf16.mxu0 0
    %79 = vmatpush1.bf16.msra.mxu0 0
    %80 = vmatprep.subr.bf16.mxu0 0
    %81 = vmatpush1.bf16.msra.mxu0 0
    %82 = vmatprep.subr.bf16.mxu0 0
    %83 = vmatpush1.bf16.msra.mxu0 0
    %84 = vmatprep.subr.bf16.mxu0 0
    %85 = vmatpush1.bf16.msra.mxu0 0
    %86 = vmatprep.subr.bf16.mxu0 0
    %87 = vmatpush1.bf16.msra.mxu0 0
    %88 = vmatprep.subr.bf16.mxu0 0
    %89 = vmatpush1.bf16.msra.mxu0 0
    %90 = vmatprep.subr.bf16.mxu0 0
    %91 = vmatpush1.bf16.msra.mxu0 0
    %92 = vmatprep.subr.bf16.mxu0 0
    %93 = vmatpush1.bf16.msra.mxu0 0
    %94 = vmatprep.subr.bf16.mxu0 0
    %95 = vmatpush1.bf16.msra.mxu0 0
    %96 = vmatprep.subr.bf16.mxu0 0
    %97 = vmatpush1.bf16.msra.mxu0 0
    %98 = vmatprep.subr.bf16.mxu0 0
    %99 = vmatpush1.bf16.msra.mxu0 0
    %100 = vmatprep.subr.bf16.mxu0 0
    %101 = vmatpush1.bf16.msra.mxu0 0
    %102 = vmatprep.subr.bf16.mxu0 0
    %103 = vmatpush1.bf16.msra.mxu0 0
    %104 = vmatprep.mubr.bf16.mxu0 0
    %105 = vmatmul.mubr.bf16.gmra.mrb[0].mxu0 %v70
    %v106 = vpop.f32.mrb[0].mxu0
    %v107 = vadd.f32 %v55, %v106
    %v108 = vpop.f32.mrb[0].mxu0
    %v109 = vpop.f32.mrb[0].mxu0
    %v110 = vadd.f32 %v55, %v109
    %v111 = vpop.f32.mrb[0].mxu0
    %112 = vdwg.mxu0
    %v113 = vmax.f32 %v107, 0.0
    %v114 = vmax.f32 %v110, 0.0
    %v115 = vpack.c.bf16 %v114, %v113
    %v116 = vld [vmem:[#allocation5 + $0x10] sm:$0xf]
    %v117 = vld [vmem:[#allocation5 + $0x14] sm:$0xf]
    %v118 = vld [vmem:[#allocation5 + $0x18] sm:$0xf]
    %v119 = vld [vmem:[#allocation5 + $0x1c] sm:$0xf]
    %v120 = vld [vmem:[#allocation5 + $0x20] sm:$0xf]
    %v121 = vld [vmem:[#allocation5 + $0x24] sm:$0xf]
    %v122 = vld [vmem:[#allocation5 + $0x28] sm:$0xf]
    %v123 = vld [vmem:[#allocation5 + $0x2c] sm:$0xf]
    %v124 = vld [vmem:[#allocation5 + $0x30] sm:$0xf]
    %v125 = vld [vmem:[#allocation5 + $0x34] sm:$0xf]
    %v126 = vld [vmem:[#allocation5 + $0x38] sm:$0xf]
    %v127 = vld [vmem:[#allocation5 + $0x3c] sm:$0xf]
    %v128 = vld [vmem:[#allocation5 + $0x40] sm:$0xf]
    %v129 = vld [vmem:[#allocation5 + $0x44] sm:$0xf]
    %v130 = vld [vmem:[#allocation5 + $0x48] sm:$0xf]
    %v131 = vld [vmem:[#allocation5 + $0x4c] sm:$0xf]
    %v132 = vld [vmem:[%s2 + $0x1] sm:$0x1]
    %v133 = vlaneseq
    %v134 = vshrl.u32 %v133, 7
    %v135 = vsub.s32 0, %v134
    %v136 = vrot.slane %v132, %v135
    %v153 = vunpack.c.l.b16 %v116
    %v154 = vunpack.c.l.b16 %v117
    %v155 = vunpack.c.l.b16 %v118
    %v156 = vunpack.c.l.b16 %v119
    %v157 = vunpack.c.l.b16 %v120
    %v158 = vunpack.c.l.b16 %v121
    %v159 = vunpack.c.l.b16 %v122
    %v160 = vunpack.c.l.b16 %v123
    %v161 = vunpack.c.l.b16 %v124
    %v162 = vunpack.c.l.b16 %v125
    %v163 = vunpack.c.l.b16 %v126
    %v164 = vunpack.c.l.b16 %v127
    %v165 = vunpack.c.l.b16 %v128
    %v166 = vunpack.c.l.b16 %v129
    %v167 = vunpack.c.l.b16 %v130
    %v168 = vunpack.c.l.b16 %v131
    %v169 = vpack.c.b16 %v154, %v153
    %v170 = vpack.c.b16 %v156, %v155
    %v171 = vpack.c.b16 %v158, %v157
    %v172 = vpack.c.b16 %v160, %v159
    %v173 = vpack.c.b16 %v162, %v161
    %v174 = vpack.c.b16 %v164, %v163
    %v175 = vpack.c.b16 %v166, %v165
    %v176 = vpack.c.b16 %v168, %v167
    %185 = vmatprep.subr.bf16.mxu0 0
    %186 = vmatpush1.bf16.msra.mxu0 %v169
    %187 = vmatprep.subr.bf16.mxu0 0
    %188 = vmatpush1.bf16.msra.mxu0 %v170
    %189 = vmatprep.subr.bf16.mxu0 0
    %190 = vmatpush1.bf16.msra.mxu0 %v171
    %191 = vmatprep.subr.bf16.mxu0 0
    %192 = vmatpush1.bf16.msra.mxu0 %v172
    %193 = vmatprep.subr.bf16.mxu0 0
    %194 = vmatpush1.bf16.msra.mxu0 %v173
    %195 = vmatprep.subr.bf16.mxu0 0
    %196 = vmatpush1.bf16.msra.mxu0 %v174
    %197 = vmatprep.subr.bf16.mxu0 0
    %198 = vmatpush1.bf16.msra.mxu0 %v175
    %199 = vmatprep.subr.bf16.mxu0 0
    %200 = vmatpush1.bf16.msra.mxu0 %v176
    %201 = vmatprep.subr.bf16.mxu0 0
    %202 = vmatpush1.bf16.msra.mxu0 0
    %203 = vmatprep.subr.bf16.mxu0 0
    %204 = vmatpush1.bf16.msra.mxu0 0
    %205 = vmatprep.subr.bf16.mxu0 0
    %206 = vmatpush1.bf16.msra.mxu0 0
    %207 = vmatprep.subr.bf16.mxu0 0
    %208 = vmatpush1.bf16.msra.mxu0 0
    %209 = vmatprep.subr.bf16.mxu0 0
    %210 = vmatpush1.bf16.msra.mxu0 0
    %211 = vmatprep.subr.bf16.mxu0 0
    %212 = vmatpush1.bf16.msra.mxu0 0
    %213 = vmatprep.subr.bf16.mxu0 0
    %214 = vmatpush1.bf16.msra.mxu0 0
    %215 = vmatprep.subr.bf16.mxu0 0
    %216 = vmatpush1.bf16.msra.mxu0 0
    %217 = vmatprep.mubr.bf16.mxu0 0
    %218 = vmatmul.mubr.bf16.gmra.mrb[0].mxu0 %v115
    %v219 = vpop.f32.mrb[0].mxu0
    %v220 = vadd.f32 %v136, %v219
    %v221 = vpop.f32.mrb[0].mxu0
    %v222 = vpop.f32.mrb[0].mxu0
    %v223 = vadd.f32 %v136, %v222
    %v224 = vpop.f32.mrb[0].mxu0
    %225 = vdwg.mxu0
    %v226 = vmax.f32 %v220, 0.0
    %v227 = vmax.f32 %v223, 0.0
    %v228 = vpack.c.bf16 %v227, %v226
    %v229 = vld [vmem:[#allocation5 + $0x50] sm:$0xf]
    %v230 = vld [vmem:[#allocation5 + $0x54] sm:$0xf]
    %v231 = vld [vmem:[#allocation5 + $0x58] sm:$0xf]
    %v232 = vld [vmem:[#allocation5 + $0x5c] sm:$0xf]
    %v233 = vld [vmem:[#allocation5 + $0x60] sm:$0xf]
    %v234 = vld [vmem:[#allocation5 + $0x64] sm:$0xf]
    %v235 = vld [vmem:[#allocation5 + $0x68] sm:$0xf]
    %v236 = vld [vmem:[#allocation5 + $0x6c] sm:$0xf]
    %v237 = vld [vmem:[#allocation5 + $0x70] sm:$0xf]
    %v238 = vld [vmem:[#allocation5 + $0x74] sm:$0xf]
    %v239 = vld [vmem:[#allocation5 + $0x78] sm:$0xf]
    %v240 = vld [vmem:[#allocation5 + $0x7c] sm:$0xf]
    %v241 = vld [vmem:[#allocation5 + $0x80] sm:$0xf]
    %v242 = vld [vmem:[#allocation5 + $0x84] sm:$0xf]
    %v243 = vld [vmem:[#allocation5 + $0x88] sm:$0xf]
    %v244 = vld [vmem:[#allocation5 + $0x8c] sm:$0xf]
    %v245 = vld [vmem:[#allocation5 + $0x90] sm:$0xf]
    %v246 = vld [vmem:[#allocation5 + $0x94] sm:$0xf]
    %v247 = vld [vmem:[#allocation5 + $0x98] sm:$0xf]
    %v248 = vld [vmem:[#allocation5 + $0x9c] sm:$0xf]
    %v253 = vunpack.c.l.b16 %v245
    %v254 = vunpack.c.l.b16 %v246
    %v255 = vunpack.c.l.b16 %v247
    %v256 = vunpack.c.l.b16 %v248
    %v257 = vpack.c.b16 %v254, %v253
    %v258 = vpack.c.b16 %v256, %v255
    %261 = vmatprep.subr.bf16.mxu0 0
    %262 = vmatpush1.bf16.msra.mxu0 %v257
    %263 = vmatprep.subr.bf16.mxu0 0
    %264 = vmatpush1.bf16.msra.mxu0 %v258
    %265 = vmatprep.subr.bf16.mxu0 0
    %266 = vmatpush1.bf16.msra.mxu0 0
    %267 = vmatprep.subr.bf16.mxu0 0
    %268 = vmatpush1.bf16.msra.mxu0 0
    %269 = vmatprep.subr.bf16.mxu0 0
    %270 = vmatpush1.bf16.msra.mxu0 0
    %271 = vmatprep.subr.bf16.mxu0 0
    %272 = vmatpush1.bf16.msra.mxu0 0
    %273 = vmatprep.subr.bf16.mxu0 0
    %274 = vmatpush1.bf16.msra.mxu0 0
    %275 = vmatprep.subr.bf16.mxu0 0
    %276 = vmatpush1.bf16.msra.mxu0 0
    %277 = vmatprep.subr.bf16.mxu0 0
    %278 = vmatpush1.bf16.msra.mxu0 0
    %279 = vmatprep.subr.bf16.mxu0 0
    %280 = vmatpush1.bf16.msra.mxu0 0
    %281 = vmatprep.subr.bf16.mxu0 0
    %282 = vmatpush1.bf16.msra.mxu0 0
    %283 = vmatprep.subr.bf16.mxu0 0
    %284 = vmatpush1.bf16.msra.mxu0 0
    %285 = vmatprep.subr.bf16.mxu0 0
    %286 = vmatpush1.bf16.msra.mxu0 0
    %287 = vmatprep.subr.bf16.mxu0 0
    %288 = vmatpush1.bf16.msra.mxu0 0
    %289 = vmatprep.subr.bf16.mxu0 0
    %290 = vmatpush1.bf16.msra.mxu0 0
    %291 = vmatprep.subr.bf16.mxu0 0
    %292 = vmatpush1.bf16.msra.mxu0 0
    %293 = vmatprep.mubr.bf16.mxu0 0
    %294 = vmatmul.mubr.bf16.gmra.mrb[0].mxu0 %v70
    %v295 = vpop.f32.mrb[0].mxu0
    %v296 = vadd.f32 0.0, %v295
    %v297 = vpop.f32.mrb[0].mxu0
    %v298 = vpop.f32.mrb[0].mxu0
    %v299 = vadd.f32 0.0, %v298
    %v300 = vpop.f32.mrb[0].mxu0
    %301 = vdwg.mxu0
    %v318 = vunpack.c.l.b16 %v229
    %v319 = vunpack.c.l.b16 %v230
    %v320 = vunpack.c.l.b16 %v231
    %v321 = vunpack.c.l.b16 %v232
    %v322 = vunpack.c.l.b16 %v233
    %v323 = vunpack.c.l.b16 %v234
    %v324 = vunpack.c.l.b16 %v235
    %v325 = vunpack.c.l.b16 %v236
    %v326 = vunpack.c.l.b16 %v237
    %v327 = vunpack.c.l.b16 %v238
    %v328 = vunpack.c.l.b16 %v239
    %v329 = vunpack.c.l.b16 %v240
    %v330 = vunpack.c.l.b16 %v241
    %v331 = vunpack.c.l.b16 %v242
    %v332 = vunpack.c.l.b16 %v243
    %v333 = vunpack.c.l.b16 %v244
    %v334 = vpack.c.b16 %v319, %v318
    %v335 = vpack.c.b16 %v321, %v320
    %v336 = vpack.c.b16 %v323, %v322
    %v337 = vpack.c.b16 %v325, %v324
    %v338 = vpack.c.b16 %v327, %v326
    %v339 = vpack.c.b16 %v329, %v328
    %v340 = vpack.c.b16 %v331, %v330
    %v341 = vpack.c.b16 %v333, %v332
    %350 = vmatprep.subr.bf16.mxu0 0
    %351 = vmatpush1.bf16.msra.mxu0 %v334
    %352 = vmatprep.subr.bf16.mxu0 0
    %353 = vmatpush1.bf16.msra.mxu0 %v335
    %354 = vmatprep.subr.bf16.mxu0 0
    %355 = vmatpush1.bf16.msra.mxu0 %v336
    %356 = vmatprep.subr.bf16.mxu0 0
    %357 = vmatpush1.bf16.msra.mxu0 %v337
    %358 = vmatprep.subr.bf16.mxu0 0
    %359 = vmatpush1.bf16.msra.mxu0 %v338
    %360 = vmatprep.subr.bf16.mxu0 0
    %361 = vmatpush1.bf16.msra.mxu0 %v339
    %362 = vmatprep.subr.bf16.mxu0 0
    %363 = vmatpush1.bf16.msra.mxu0 %v340
    %364 = vmatprep.subr.bf16.mxu0 0
    %365 = vmatpush1.bf16.msra.mxu0 %v341
    %366 = vmatprep.subr.bf16.mxu0 0
    %367 = vmatpush1.bf16.msra.mxu0 0
    %368 = vmatprep.subr.bf16.mxu0 0
    %369 = vmatpush1.bf16.msra.mxu0 0
    %370 = vmatprep.subr.bf16.mxu0 0
    %371 = vmatpush1.bf16.msra.mxu0 0
    %372 = vmatprep.subr.bf16.mxu0 0
    %373 = vmatpush1.bf16.msra.mxu0 0
    %374 = vmatprep.subr.bf16.mxu0 0
    %375 = vmatpush1.bf16.msra.mxu0 0
    %376 = vmatprep.subr.bf16.mxu0 0
    %377 = vmatpush1.bf16.msra.mxu0 0
    %378 = vmatprep.subr.bf16.mxu0 0
    %379 = vmatpush1.bf16.msra.mxu0 0
    %380 = vmatprep.subr.bf16.mxu0 0
    %381 = vmatpush1.bf16.msra.mxu0 0
    %382 = vmatprep.mubr.bf16.mxu0 0
    %383 = vmatmul.mubr.bf16.gmra.mrb[0].mxu0 %v228
    %v384 = vpop.f32.mrb[0].mxu0
    %v385 = vadd.f32 %v296, %v384
    %v386 = vpop.f32.mrb[0].mxu0
    %v387 = vpop.f32.mrb[0].mxu0
    %v388 = vadd.f32 %v299, %v387
    %v389 = vpop.f32.mrb[0].mxu0
    %390 = vdwg.mxu0
    %v391 = vld [vmem:[%s2 + $0x2] sm:$0x1]
    %v392 = vlaneseq
    %v393 = vshrl.u32 %v392, 7
    %v394 = vsub.s32 0, %v393
    %v395 = vrot.slane %v391, %v394
    %v396 = vadd.f32 %v385, %v395
    %v397 = vadd.f32 %v388, %v395
    %v398 = vpack.c.bf16 %v397, %v396
    %v400 = vunpack.c.l.b16 %v398
    %v401 = vunpack.c.h.b16 %v398
    %v402 = vpack.c.b16 %v400, %v400
    %v403 = vpack.c.b16 %v401, %v401
    %406 = vst [vmem:[#allocation7] sm:$0xf] %v402
    %407 = vst [vmem:[#allocation7 + $0x4] sm:$0xf] %v403
    // Predicated region
    $region22: #{tpu_custom_call.1} parent=1 // pred_check
      _
    $region23: #{tpu_custom_call.1} parent=1 // pred_check_branch
      %409 = sbr.rel (0) target = $region25
    $region24: #{tpu_custom_call.1} parent=1 // pred_region
      %s411 = ssub.s32 128, 128
      %412 = vsyncadd [#allocation4], %s411
      %s413 = sshll.u32 [#allocation7], 4
      %s414 = int_to_ptr.vmem [resolvable:$true] %s413
      %419 = dma.vmem_to_hbm [thread:$0]  %s414, 128, %s3, [#allocation4], 64, 64, 4
    $region25: #{tpu_custom_call.1} parent=1 // pred_fallthru
      _
    // Predicated region
    $region26: #{tpu_custom_call.1} parent=1 // pred_check
      _
    $region27: #{tpu_custom_call.1} parent=1 // pred_check_branch
      %421 = sbr.rel (0) target = $region29
    $region28: #{tpu_custom_call.1} parent=1 // pred_region
      %422 = dma.done [#allocation4], 128
    $region29: #{tpu_custom_call.1} parent=1 // pred_fallthru
      _
    %423 = vsyncpa [#allocation3], 1
    %424 = vsyncpa [#allocation6], 1
    %425 = vsyncpa [#allocation4], 1

</llo_original>
